<compile_context>
chip_gen: v7x
topology: tpu7x:2x2x1
jax: 0.10.0
libtpu: 0.0.40
codegen_flags: <defaults>
</compile_context>

<pallas_src>
import functools

import jax
import jax.numpy as jnp
from jax import lax
from jax.experimental import pallas as pl
from jax.experimental.pallas import tpu as pltpu


def _round_up(x: int, m: int) -> int:
    return ((x + m - 1) // m) * m


def _clip_contrastive_kernel(ht_ref, h_ref, out_ref,
                             colp_ref, cmax_ref, csum_ref, sacc_ref,
                             *, tau, d, n, block_rows):
    i = pl.program_id(0)

    @pl.when(i == 0)
    def _init():
        colp_ref[...] = jnp.zeros_like(colp_ref)
        csum_ref[...] = jnp.zeros_like(csum_ref)
        cmax_ref[...] = jnp.full(cmax_ref.shape, -1e30, jnp.float32)
        sacc_ref[0] = jnp.float32(0.0)

    ht = ht_ref[...]          # (T, 2D)  -- matmul dtype (f32 or bf16)
    h = h_ref[...]            # (2D, N)  -- resident across all grid steps

    # Fused gram:  sim = Ht @ H == H_v.T@H_v + H_x.T@H_x   (f32 accumulation).
    sim = jnp.dot(ht, h, preferred_element_type=jnp.float32)               # (T, N)
    # dot = H_v.T @ H_x restricted to this row block (native layout as well).
    dot = jnp.dot(ht[:, :d], h[d:, :], preferred_element_type=jnp.float32)  # (T, N)

    # Mask rows beyond N (only the last, partial block has any).
    t = ht.shape[0]
    row_ids = i * block_rows + lax.broadcasted_iota(jnp.int32, (t, 1), 0)
    valid = row_ids < n                                                     # (T, 1)
    sim = jnp.where(valid, sim, 0.0)
    dot = jnp.where(valid, dot, 0.0)

    # target rows (un-scaled by 1/(2*tau)): row softmax of sim.
    smax = jnp.max(sim, axis=-1, keepdims=True)
    p = jnp.exp(sim - smax)
    p = p * pl.reciprocal(jnp.sum(p, axis=-1, keepdims=True), approx=True)
    p = jnp.where(valid, p, 0.0)            # masked rows contribute nothing

    # Row log-sum-exp of dot.
    rmax = jnp.max(dot, axis=-1, keepdims=True)
    rlse = rmax + jnp.log(jnp.sum(jnp.exp(dot - rmax), axis=-1, keepdims=True))

    # Fused-CE scalar partial:  sum_ij p[i,j] * (rlse[i] - 2*dot[i,j]).
    sacc_ref[0] += jnp.sum(p * (rlse - 2.0 * dot))

    # Column accumulators: sum_i p[i,j] and online column log-sum-exp of dot.
    colp_ref[...] += jnp.sum(p, axis=0, keepdims=True)
    dcol = jnp.where(valid, dot, -1e30)     # exclude padded rows from col-LSE
    cmax_old = cmax_ref[...]
    cmax_new = jnp.maximum(cmax_old, jnp.max(dcol, axis=0, keepdims=True))
    csum_ref[...] = (csum_ref[...] * jnp.exp(cmax_old - cmax_new)
                     + jnp.sum(jnp.exp(dcol - cmax_new), axis=0, keepdims=True))
    cmax_ref[...] = cmax_new

    @pl.when(i == pl.num_programs(0) - 1)
    def _finalize():
        clse = cmax_ref[...] + jnp.log(csum_ref[...])                    # (1, N)
        total = sacc_ref[0] + jnp.sum(clse * colp_ref[...])
        out_ref[0, 0] = total / (2.0 * tau * n)


def clip_contrastive_loss(h_v, h_x, tau: float, *,
                          block_rows: int = 256,
                          matmul_dtype=None,
                          vmem_limit_bytes: int = 48 * 1024 * 1024):
    """Pallas implementation of CLIPContrastiveLoss.forward.

    h_v, h_x: (D, N) arrays (feature_dim, batch). Returns a scalar f32 loss.
    """
    assert h_v.shape == h_x.shape and h_v.ndim == 2
    d, n = h_v.shape

    # Fused gram operand: H = [H_v; H_x] (2D, N); Ht = H.T (N, 2D).  The single
    # wrapper-side transpose gives the kernel native MXU layouts for all dots.
    h = jnp.concatenate([h_v, h_x], axis=0)
    if matmul_dtype is not None:
        h = h.astype(matmul_dtype)          # e.g. bf16 on v6e/v7x (f32 accum kept)
    ht = h.T

    # Row-tile size: multiple of 8 sublanes, never larger than (padded) N.
    t = min(_round_up(max(block_rows, 8), 8), _round_up(n, 8))
    nb = pl.cdiv(n, t)

    # TODO(synk): if many tiny (D, N) loss instances are evaluated, batch them
    # through one pallas_call (extra leading grid axis) instead of per-call.

    kernel = functools.partial(_clip_contrastive_kernel,
                               tau=float(tau), d=d, n=n, block_rows=t)
    out = pl.pallas_call(
        kernel,
        out_shape=jax.ShapeDtypeStruct((1, 1), jnp.float32),
        grid=(nb,),
        in_specs=[
            pl.BlockSpec((t, 2 * d), lambda i: (i, 0)),       # Ht row block
            pl.BlockSpec((2 * d, n), lambda i: (0, 0)),       # H, resident
        ],
        out_specs=pl.BlockSpec((1, 1), lambda i: (0, 0),
                               memory_space=pltpu.SMEM),
        scratch_shapes=[
            pltpu.VMEM((1, n), jnp.float32),   # colp: sum_i target_unscaled
            pltpu.VMEM((1, n), jnp.float32),   # cmax: running column max of dot
            pltpu.VMEM((1, n), jnp.float32),   # csum: running column sum-exp
            pltpu.SMEM((1,), jnp.float32),     # scalar loss partial
        ],
        compiler_params=pltpu.CompilerParams(
            dimension_semantics=("arbitrary",),   # row axis carries accumulators
            vmem_limit_bytes=vmem_limit_bytes,
        ),
    )(ht, h)
    return out[0, 0]


def _reference_loss(h_v, h_x, tau: float):
    # Plain-JAX reference matching the PyTorch forward (for sanity check).
    sim = h_v.T @ h_v + h_x.T @ h_x
    target = jax.nn.softmax(sim, axis=-1) / (2.0 * tau)
    dot = h_v.T @ h_x
    ce1 = jnp.mean(-jnp.sum(target * jax.nn.log_softmax(dot, axis=-1), axis=-1))
    ce2 = jnp.mean(
        -jnp.sum(target.T * jax.nn.log_softmax(dot.T, axis=-1), axis=-1))
    return ce1 + ce2


if __name__ == "__main__":
    tau = 0.07
    key = jax.random.PRNGKey(0)

    # (feature_dim D, batch N) so that H_v.T @ H_v is (N, N), as in the module.
    # Cases: single block, multi-block exact tiling, multi-block with masked tail.
    cases = ((32, 8, 256), (32, 48, 16), (32, 40, 16))
    for (D, N, block_rows) in cases:
        key, kv, kx = jax.random.split(key, 3)
        h_v = jax.random.normal(kv, (D, N), dtype=jnp.float32)
        h_x = jax.random.normal(kx, (D, N), dtype=jnp.float32)

        loss = clip_contrastive_loss(h_v, h_x, tau, block_rows=block_rows)
        loss = jax.block_until_ready(loss)

        ref = _reference_loss(h_v, h_x, tau)
        # Tolerance accounts for the approximate (EUP) reciprocal in the softmax.
        assert jnp.allclose(loss, ref, rtol=5e-3, atol=5e-3), (D, N, loss, ref)

    print("KERNEL_OK")
</pallas_src>

<mosaic_0001>
module attributes {stable_mosaic.version = 11 : i64} {
  func.func @_clip_contrastive_kernel(%arg0: i32, %arg1: memref<8x64xf32, #tpu.memory_space<vmem>>, %arg2: memref<64x8xf32, #tpu.memory_space<vmem>>, %arg3: memref<1x1xf32, #tpu.memory_space<smem>>, %arg4: memref<1x8xf32, #tpu.memory_space<vmem>>, %arg5: memref<1x8xf32, #tpu.memory_space<vmem>>, %arg6: memref<1x8xf32, #tpu.memory_space<vmem>>, %arg7: memref<1xf32, #tpu.memory_space<smem>>) attributes {dimension_semantics = [#tpu.dimension_semantics<arbitrary>], iteration_bounds = array<i64: 1>, scalar_prefetch = 0 : i64, scratch_operands = 4 : i64, tpu.core_type = #tpu.core_type<tc>, window_params = [{transform_indices = @transform_0, window_bounds = array<i64: 8, 64>}, {pipeline_mode = #tpu.pipeline_mode<synchronous>, transform_indices = @transform_1, window_bounds = array<i64: 64, 8>}, {transform_indices = @transform_2, window_bounds = array<i64: 1, 1>}]} {
    %c0_i32 = arith.constant 0 : i32
    %0 = arith.cmpi eq, %arg0, %c0_i32 : i32
    %1 = arith.extui %0 : i1 to i32
    %c0_i32_0 = arith.constant 0 : i32
    %2 = arith.cmpi ne, %1, %c0_i32_0 : i32
    scf.if %2 {
      %cst_35 = arith.constant 0.000000e+00 : f32
      %86 = vector.broadcast %cst_35 : f32 to vector<1x8xf32>
      %c0_36 = arith.constant 0 : index
      %c0_37 = arith.constant 0 : index
      %87 = vector.load %arg4[%c0_36, %c0_37] : memref<1x8xf32, #tpu.memory_space<vmem>>, vector<1x8xf32>
      tpu.vector_store %arg4[%c0_36, %c0_37], %86 {strides = array<i32>} : memref<1x8xf32, #tpu.memory_space<vmem>>, vector<1x8xf32>,
      %cst_38 = arith.constant 0.000000e+00 : f32
      %88 = vector.broadcast %cst_38 : f32 to vector<1x8xf32>
      %c0_39 = arith.constant 0 : index
      %c0_40 = arith.constant 0 : index
      %89 = vector.load %arg6[%c0_39, %c0_40] : memref<1x8xf32, #tpu.memory_space<vmem>>, vector<1x8xf32>
      tpu.vector_store %arg6[%c0_39, %c0_40], %88 {strides = array<i32>} : memref<1x8xf32, #tpu.memory_space<vmem>>, vector<1x8xf32>,
      %cst_41 = arith.constant -1.000000e+30 : f32
      %90 = vector.broadcast %cst_41 : f32 to vector<1x8xf32>
      %c0_42 = arith.constant 0 : index
      %c0_43 = arith.constant 0 : index
      %91 = vector.load %arg5[%c0_42, %c0_43] : memref<1x8xf32, #tpu.memory_space<vmem>>, vector<1x8xf32>
      tpu.vector_store %arg5[%c0_42, %c0_43], %90 {strides = array<i32>} : memref<1x8xf32, #tpu.memory_space<vmem>>, vector<1x8xf32>,
      %cst_44 = arith.constant 0.000000e+00 : f32
      %c0_45 = arith.constant 0 : index
      %92 = memref.load %arg7[%c0_45] : memref<1xf32, #tpu.memory_space<smem>>
      memref.store %cst_44, %arg7[%c0_45] : memref<1xf32, #tpu.memory_space<smem>>
    } else {
    }
    %c0 = arith.constant 0 : index
    %c0_1 = arith.constant 0 : index
    %3 = vector.load %arg1[%c0, %c0_1] : memref<8x64xf32, #tpu.memory_space<vmem>>, vector<8x64xf32>
    %c0_2 = arith.constant 0 : index
    %c0_3 = arith.constant 0 : index
    %4 = vector.load %arg2[%c0_2, %c0_3] : memref<64x8xf32, #tpu.memory_space<vmem>>, vector<64x8xf32>
    %cst = arith.constant dense<0.000000e+00> : vector<8x8xf32>
    %5 = tpu.matmul %3, %4, %cst {dimension_numbers = #tpu.dot_dimension_numbers<[1], [0], [0], [1], [0, 0, 1, 1], [], []>} : vector<8x64xf32>, vector<64x8xf32>, vector<8x8xf32> -> vector<8x8xf32>
    %6 = vector.extract_strided_slice %3 {offsets = [0, 0], sizes = [8, 32], strides = [1, 1]} : vector<8x64xf32> to vector<8x32xf32>
    %7 = vector.extract_strided_slice %4 {offsets = [32, 0], sizes = [32, 8], strides = [1, 1]} : vector<64x8xf32> to vector<32x8xf32>
    %cst_4 = arith.constant dense<0.000000e+00> : vector<8x8xf32>
    %8 = tpu.matmul %6, %7, %cst_4 {dimension_numbers = #tpu.dot_dimension_numbers<[1], [0], [0], [1], [0, 0, 1, 1], [], []>} : vector<8x32xf32>, vector<32x8xf32>, vector<8x8xf32> -> vector<8x8xf32>
    %c8_i32 = arith.constant 8 : i32
    %9 = arith.muli %arg0, %c8_i32 : i32
    %10 = tpu.iota {dimensions = array<i32: 0>} : vector<8x1xi32>
    %11 = vector.broadcast %9 : i32 to vector<8x1xi32>
    %12 = arith.addi %11, %10 : vector<8x1xi32>
    %c8_i32_5 = arith.constant 8 : i32
    %13 = vector.broadcast %c8_i32_5 : i32 to vector<8x1xi32>
    %14 = arith.cmpi slt, %12, %13 : vector<8x1xi32>
    %cst_6 = arith.constant 0.000000e+00 : f32
    %15 = vector.shape_cast %14 : vector<8x1xi1> to vector<8x1xi1>
    %16 = vector.broadcast %15 : vector<8x1xi1> to vector<8x8xi1>
    %17 = vector.broadcast %cst_6 : f32 to vector<8x8xf32>
    %18 = arith.select %16, %5, %17 : vector<8x8xi1>, vector<8x8xf32>
    %cst_7 = arith.constant 0.000000e+00 : f32
    %19 = vector.shape_cast %14 : vector<8x1xi1> to vector<8x1xi1>
    %20 = vector.broadcast %19 : vector<8x1xi1> to vector<8x8xi1>
    %21 = vector.broadcast %cst_7 : f32 to vector<8x8xf32>
    %22 = arith.select %20, %8, %21 : vector<8x8xi1>, vector<8x8xf32>
    %cst_8 = arith.constant dense<0xFF800000> : vector<8xf32>
    %23 = vector.multi_reduction <maximumf>, %18, %cst_8 [1] : vector<8x8xf32> to vector<8xf32>
    %24 = vector.shape_cast %23 : vector<8xf32> to vector<8x1xf32>
    %25 = vector.broadcast %24 : vector<8x1xf32> to vector<8x8xf32>
    %26 = arith.subf %18, %25 : vector<8x8xf32>
    %27 = math.exp %26 : vector<8x8xf32>
    %cst_9 = arith.constant dense<0.000000e+00> : vector<8xf32>
    %28 = vector.multi_reduction <add>, %27, %cst_9 [1] : vector<8x8xf32> to vector<8xf32>
    %29 = vector.shape_cast %28 : vector<8xf32> to vector<8x1xf32>
    %30 = tpu.reciprocal %29 {approx = true} : vector<8x1xf32> -> vector<8x1xf32>
    %31 = vector.broadcast %30 : vector<8x1xf32> to vector<8x8xf32>
    %32 = arith.mulf %27, %31 : vector<8x8xf32>
    %cst_10 = arith.constant 0.000000e+00 : f32
    %33 = vector.shape_cast %14 : vector<8x1xi1> to vector<8x1xi1>
    %34 = vector.broadcast %33 : vector<8x1xi1> to vector<8x8xi1>
    %35 = vector.broadcast %cst_10 : f32 to vector<8x8xf32>
    %36 = arith.select %34, %32, %35 : vector<8x8xi1>, vector<8x8xf32>
    %cst_11 = arith.constant dense<0xFF800000> : vector<8xf32>
    %37 = vector.multi_reduction <maximumf>, %22, %cst_11 [1] : vector<8x8xf32> to vector<8xf32>
    %38 = vector.shape_cast %37 : vector<8xf32> to vector<8x1xf32>
    %39 = vector.broadcast %38 : vector<8x1xf32> to vector<8x8xf32>
    %40 = arith.subf %22, %39 : vector<8x8xf32>
    %41 = math.exp %40 : vector<8x8xf32>
    %cst_12 = arith.constant dense<0.000000e+00> : vector<8xf32>
    %42 = vector.multi_reduction <add>, %41, %cst_12 [1] : vector<8x8xf32> to vector<8xf32>
    %43 = vector.shape_cast %42 : vector<8xf32> to vector<8x1xf32>
    %44 = math.log %43 : vector<8x1xf32>
    %45 = arith.addf %38, %44 : vector<8x1xf32>
    %c0_13 = arith.constant 0 : index
    %46 = memref.load %arg7[%c0_13] : memref<1xf32, #tpu.memory_space<smem>>
    %cst_14 = arith.constant 2.000000e+00 : f32
    %47 = vector.broadcast %cst_14 : f32 to vector<8x8xf32>
    %48 = arith.mulf %47, %22 : vector<8x8xf32>
    %49 = vector.broadcast %45 : vector<8x1xf32> to vector<8x8xf32>
    %50 = arith.subf %49, %48 : vector<8x8xf32>
    %51 = arith.mulf %36, %50 : vector<8x8xf32>
    %52 = vector.shape_cast %51 : vector<8x8xf32> to vector<1x8x8xf32>
    %cst_15 = arith.constant dense<0.000000e+00> : vector<1xf32>
    %53 = vector.multi_reduction <add>, %52, %cst_15 [1, 2] : vector<1x8x8xf32> to vector<1xf32>
    %54 = vector.shape_cast %53 : vector<1xf32> to vector<1x1x1xf32>
    %55 = vector.extract %54[0, 0, 0] : f32 from vector<1x1x1xf32>
    %56 = arith.addf %46, %55 : f32
    %c0_16 = arith.constant 0 : index
    %57 = memref.load %arg7[%c0_16] : memref<1xf32, #tpu.memory_space<smem>>
    memref.store %56, %arg7[%c0_16] : memref<1xf32, #tpu.memory_space<smem>>
    %c0_17 = arith.constant 0 : index
    %c0_18 = arith.constant 0 : index
    %58 = vector.load %arg4[%c0_17, %c0_18] : memref<1x8xf32, #tpu.memory_space<vmem>>, vector<1x8xf32>
    %cst_19 = arith.constant dense<0.000000e+00> : vector<8xf32>
    %59 = vector.multi_reduction <add>, %36, %cst_19 [0] : vector<8x8xf32> to vector<8xf32>
    %60 = vector.shape_cast %59 : vector<8xf32> to vector<1x8xf32>
    %61 = arith.addf %58, %60 : vector<1x8xf32>
    %c0_20 = arith.constant 0 : index
    %c0_21 = arith.constant 0 : index
    %62 = vector.load %arg4[%c0_20, %c0_21] : memref<1x8xf32, #tpu.memory_space<vmem>>, vector<1x8xf32>
    tpu.vector_store %arg4[%c0_20, %c0_21], %61 {strides = array<i32>} : memref<1x8xf32, #tpu.memory_space<vmem>>, vector<1x8xf32>,
    %cst_22 = arith.constant -1.000000e+30 : f32
    %63 = vector.shape_cast %14 : vector<8x1xi1> to vector<8x1xi1>
    %64 = vector.broadcast %63 : vector<8x1xi1> to vector<8x8xi1>
    %65 = vector.broadcast %cst_22 : f32 to vector<8x8xf32>
    %66 = arith.select %64, %22, %65 : vector<8x8xi1>, vector<8x8xf32>
    %c0_23 = arith.constant 0 : index
    %c0_24 = arith.constant 0 : index
    %67 = vector.load %arg5[%c0_23, %c0_24] : memref<1x8xf32, #tpu.memory_space<vmem>>, vector<1x8xf32>
    %cst_25 = arith.constant dense<0xFF800000> : vector<8xf32>
    %68 = vector.multi_reduction <maximumf>, %66, %cst_25 [0] : vector<8x8xf32> to vector<8xf32>
    %69 = vector.shape_cast %68 : vector<8xf32> to vector<1x8xf32>
    %70 = arith.maximumf %67, %69 : vector<1x8xf32>
    %c0_26 = arith.constant 0 : index
    %c0_27 = arith.constant 0 : index
    %71 = vector.load %arg6[%c0_26, %c0_27] : memref<1x8xf32, #tpu.memory_space<vmem>>, vector<1x8xf32>
    %72 = arith.subf %67, %70 : vector<1x8xf32>
    %73 = math.exp %72 : vector<1x8xf32>
    %74 = arith.mulf %71, %73 : vector<1x8xf32>
    %75 = vector.broadcast %70 : vector<1x8xf32> to vector<8x8xf32>
    %76 = arith.subf %66, %75 : vector<8x8xf32>
    %77 = math.exp %76 : vector<8x8xf32>
    %cst_28 = arith.constant dense<0.000000e+00> : vector<8xf32>
    %78 = vector.multi_reduction <add>, %77, %cst_28 [0] : vector<8x8xf32> to vector<8xf32>
    %79 = vector.shape_cast %78 : vector<8xf32> to vector<1x8xf32>
    %80 = arith.addf %74, %79 : vector<1x8xf32>
    %c0_29 = arith.constant 0 : index
    %c0_30 = arith.constant 0 : index
    %81 = vector.load %arg6[%c0_29, %c0_30] : memref<1x8xf32, #tpu.memory_space<vmem>>, vector<1x8xf32>
    tpu.vector_store %arg6[%c0_29, %c0_30], %80 {strides = array<i32>} : memref<1x8xf32, #tpu.memory_space<vmem>>, vector<1x8xf32>,
    %c0_31 = arith.constant 0 : index
    %c0_32 = arith.constant 0 : index
    %82 = vector.load %arg5[%c0_31, %c0_32] : memref<1x8xf32, #tpu.memory_space<vmem>>, vector<1x8xf32>
    tpu.vector_store %arg5[%c0_31, %c0_32], %70 {strides = array<i32>} : memref<1x8xf32, #tpu.memory_space<vmem>>, vector<1x8xf32>,
    %c0_i32_33 = arith.constant 0 : i32
    %83 = arith.cmpi eq, %arg0, %c0_i32_33 : i32
    %84 = arith.extui %83 : i1 to i32
    %c0_i32_34 = arith.constant 0 : i32
    %85 = arith.cmpi ne, %84, %c0_i32_34 : i32
    scf.if %85 {
      %c0_35 = arith.constant 0 : index
      %c0_36 = arith.constant 0 : index
      %86 = vector.load %arg5[%c0_35, %c0_36] : memref<1x8xf32, #tpu.memory_space<vmem>>, vector<1x8xf32>
      %c0_37 = arith.constant 0 : index
      %c0_38 = arith.constant 0 : index
      %87 = vector.load %arg6[%c0_37, %c0_38] : memref<1x8xf32, #tpu.memory_space<vmem>>, vector<1x8xf32>
      %88 = math.log %87 : vector<1x8xf32>
      %89 = arith.addf %86, %88 : vector<1x8xf32>
      %c0_39 = arith.constant 0 : index
      %90 = memref.load %arg7[%c0_39] : memref<1xf32, #tpu.memory_space<smem>>
      %c0_40 = arith.constant 0 : index
      %c0_41 = arith.constant 0 : index
      %91 = vector.load %arg4[%c0_40, %c0_41] : memref<1x8xf32, #tpu.memory_space<vmem>>, vector<1x8xf32>
      %92 = arith.mulf %89, %91 : vector<1x8xf32>
      %93 = vector.shape_cast %92 : vector<1x8xf32> to vector<1x1x8xf32>
      %cst_42 = arith.constant dense<0.000000e+00> : vector<1xf32>
      %94 = vector.multi_reduction <add>, %93, %cst_42 [1, 2] : vector<1x1x8xf32> to vector<1xf32>
      %95 = vector.shape_cast %94 : vector<1xf32> to vector<1x1x1xf32>
      %96 = vector.extract %95[0, 0, 0] : f32 from vector<1x1x1xf32>
      %97 = arith.addf %90, %96 : f32
      %cst_43 = arith.constant 1.120000e+00 : f32
      %98 = arith.divf %97, %cst_43 : f32
      %c0_44 = arith.constant 0 : index
      %c0_45 = arith.constant 0 : index
      %99 = memref.load %arg3[%c0_44, %c0_45] : memref<1x1xf32, #tpu.memory_space<smem>>
      memref.store %98, %arg3[%c0_44, %c0_45] : memref<1x1xf32, #tpu.memory_space<smem>>
    } else {
    }
    return
  }
  func.func @transform_0(%arg0: i32) -> (i32, i32) {
    %c0_i32 = arith.constant 0 : i32
    %c0_i32_0 = arith.constant 0 : i32
    return %arg0, %c0_i32 : i32, i32
  }
  func.func @transform_1(%arg0: i32) -> (i32, i32) {
    %c0_i32 = arith.constant 0 : i32
    %c0_i32_0 = arith.constant 0 : i32
    %c0_i32_1 = arith.constant 0 : i32
    return %c0_i32, %c0_i32_0 : i32, i32
  }
  func.func @transform_2(%arg0: i32) -> (i32, i32) {
    %c0_i32 = arith.constant 0 : i32
    %c0_i32_0 = arith.constant 0 : i32
    %c0_i32_1 = arith.constant 0 : i32
    return %c0_i32, %c0_i32_0 : i32, i32
  }
}

</mosaic_0001>

<llo_original>
// kernel: tpu_custom_call.1
$region0: #{tpu_custom_call.1}
  #allocation0 [shape = 'u32[]', space=smem, size = 0x4, offset = 0x4, fixed_abs, tag = 'smem constant byte address 0x4 - core index']
  #allocation1 [shape = 'u32[144,128]{1,0:T(1,128)}', space=vmem, size = 0x12000, scoped, tag = 'internal scratch']
  #allocation2 [shape = 'f32[1,8]{1,0:T(1,128)}', space=vmem, size = 0x200, scoped, tag = 'scratch operand']
  #allocation3 [shape = 'f32[1,8]{1,0:T(1,128)}', space=vmem, size = 0x200, scoped, tag = 'scratch operand']
  #allocation4 [shape = 'f32[1,8]{1,0:T(1,128)}', space=vmem, size = 0x200, scoped, tag = 'scratch operand']
  #allocation5 [shape = 'f32[1]{0:T(128)}', space=smem, size = 0x200, scoped, tag = 'scratch operand']
  %s0 = inlined_call_operand.vmem [shape: f32[8,64], index: 0, kind: input, shape index: {}]
  %s1 = inlined_call_operand.vmem [shape: f32[64,8], index: 1, kind: input, shape index: {}]
  %s2 = inlined_call_operand.hbm [shape: f32[1,1], index: 2, kind: output, shape index: {}]
  %s3 = sld [smem:[#allocation0]]
  $region26: #{tpu_custom_call.1} parent=0
    _
  %s5 = ssub.s32 1, %s3
  %s6 = scalar_select 0, %s5, %s3
  $region1: #{tpu_custom_call.1} parent=0
    #allocation6 [shape = 'u8[512]{0}', space=smem, size = 0x200, scoped, tag = 'output window, operand 0, single buffered']
    #allocation7 [shape = 's32[1]{0}', space=sflag, size = 0x4, scoped, tag = 'scoped memory for tpu_custom_call.1']
    %7 = vsyncpa [#allocation7], 0
    // Predicated region
    $region2: #{tpu_custom_call.1} parent=1 // pred_check
      _
    $region3: #{tpu_custom_call.1} parent=1 // pred_check_branch
      %9 = sbr.rel (0) target = $region5
    $region4: #{tpu_custom_call.1} parent=1 // pred_region
      _
    $region5: #{tpu_custom_call.1} parent=1 // pred_fallthru
      _
    // Predicated region
    $region6: #{tpu_custom_call.1} parent=1 // pred_check
      _
    $region7: #{tpu_custom_call.1} parent=1 // pred_check_branch
      %11 = sbr.rel (0) target = $region9
    $region8: #{tpu_custom_call.1} parent=1 // pred_region
      _
    $region9: #{tpu_custom_call.1} parent=1 // pred_fallthru
      _
    %p12 = scmp.eq.s32.totalorder 0, 0
    // Predicated region
    $region10: #{tpu_custom_call.1} parent=1 // pred_check
      %p13 = pneg %p12
    $region11: #{tpu_custom_call.1} parent=1 // pred_check_branch
      %15 = sbr.rel (%p13) target = $region13
    $region12: #{tpu_custom_call.1} parent=1 // pred_region
      %vm16 = vcmask 57344
      %17 = vst.msk [vmem:[#allocation2] sm:$0x1] %vm16, 0.0
      %18 = vst.msk [vmem:[#allocation4] sm:$0x1] %vm16, 0.0
      %19 = vst.msk [vmem:[#allocation3] sm:$0x1] %vm16, -1e+30
      %s20 = scalar_lea.smem [#allocation5], 0
      %21 = sst [smem:[%s20]] 0.0
    $region13: #{tpu_custom_call.1} parent=1 // pred_fallthru
      _
    %v22 = vld [vmem:[%s0] sm:$0xff]
    %v23 = vld [vmem:[%s1] sm:$0xff]
    %v24 = vld [vmem:[%s1 + $0x8] sm:$0xff]
    %v25 = vld [vmem:[%s1 + $0x10] sm:$0xff]
    %v26 = vld [vmem:[%s1 + $0x18] sm:$0xff]
    %v27 = vld [vmem:[%s1 + $0x20] sm:$0xff]
    %v28 = vld [vmem:[%s1 + $0x28] sm:$0xff]
    %v29 = vld [vmem:[%s1 + $0x30] sm:$0xff]
    %v30 = vld [vmem:[%s1 + $0x38] sm:$0xff]
    %vm31 = vcmask 523264
    %v33 = vsel %vm31, %v22, 0
    %35 = vmatprep.subr.mxu0 0.0
    %36 = vmatpush1.msra.mxu0 %v23
    %37 = vmatprep.subr.mxu0 0.0
    %38 = vmatpush1.msra.mxu0 %v24
    %39 = vmatprep.subr.mxu0 0.0
    %40 = vmatpush1.msra.mxu0 %v25
    %41 = vmatprep.subr.mxu0 0.0
    %42 = vmatpush1.msra.mxu0 %v26
    %43 = vmatprep.subr.mxu0 0.0
    %44 = vmatpush1.msra.mxu0 %v27
    %45 = vmatprep.subr.mxu0 0.0
    %46 = vmatpush1.msra.mxu0 %v28
    %47 = vmatprep.subr.mxu0 0.0
    %48 = vmatpush1.msra.mxu0 %v29
    %49 = vmatprep.subr.mxu0 0.0
    %50 = vmatpush1.msra.mxu0 %v30
    %51 = vmatprep.subr.mxu0 0.0
    %52 = vmatpush1.msra.mxu0 0.0
    %53 = vmatprep.subr.mxu0 0.0
    %54 = vmatpush1.msra.mxu0 0.0
    %55 = vmatprep.subr.mxu0 0.0
    %56 = vmatpush1.msra.mxu0 0.0
    %57 = vmatprep.subr.mxu0 0.0
    %58 = vmatpush1.msra.mxu0 0.0
    %59 = vmatprep.subr.mxu0 0.0
    %60 = vmatpush1.msra.mxu0 0.0
    %61 = vmatprep.subr.mxu0 0.0
    %62 = vmatpush1.msra.mxu0 0.0
    %63 = vmatprep.subr.mxu0 0.0
    %64 = vmatpush1.msra.mxu0 0.0
    %65 = vmatprep.subr.mxu0 0.0
    %66 = vmatpush1.msra.mxu0 0.0
    %67 = vmatprep.subr.mxu0 0.0
    %68 = vmatpush1.msra.mxu0 0.0
    %69 = vmatprep.subr.mxu0 0.0
    %70 = vmatpush1.msra.mxu0 0.0
    %71 = vmatprep.subr.mxu0 0.0
    %72 = vmatpush1.msra.mxu0 0.0
    %73 = vmatprep.subr.mxu0 0.0
    %74 = vmatpush1.msra.mxu0 0.0
    %75 = vmatprep.subr.mxu0 0.0
    %76 = vmatpush1.msra.mxu0 0.0
    %77 = vmatprep.subr.mxu0 0.0
    %78 = vmatpush1.msra.mxu0 0.0
    %79 = vmatprep.subr.mxu0 0.0
    %80 = vmatpush1.msra.mxu0 0.0
    %81 = vmatprep.subr.mxu0 0.0
    %82 = vmatpush1.msra.mxu0 0.0
    %83 = vmatprep.subr.mxu0 0.0
    %84 = vmatpush1.msra.mxu0 0.0
    %85 = vmatprep.subr.mxu0 0.0
    %86 = vmatpush1.msra.mxu0 0.0
    %87 = vmatprep.subr.mxu0 0.0
    %88 = vmatpush1.msra.mxu0 0.0
    %89 = vmatprep.subr.mxu0 0.0
    %90 = vmatpush1.msra.mxu0 0.0
    %91 = vmatprep.subr.mxu0 0.0
    %92 = vmatpush1.msra.mxu0 0.0
    %93 = vmatprep.subr.mxu0 0.0
    %94 = vmatpush1.msra.mxu0 0.0
    %95 = vmatprep.subr.mxu0 0.0
    %96 = vmatpush1.msra.mxu0 0.0
    %97 = vmatprep.subr.mxu0 0.0
    %98 = vmatpush1.msra.mxu0 0.0
    %99 = vmatprep.mubr.f32.mxu0 0.0
    %100 = vmatmul.mubr.f32.gmra.mrb[0].mxu0 %v33
    %v101 = vpop.f32.mrb[0].mxu0
    %v102 = vadd.f32 0.0, %v101
    %v103 = vpop.f32.mrb[0].mxu0
    %104 = vdwg.mxu0
    %vm105 = vcmask 261120
    %v106 = vsel %vm105, %v22, 0
    %108 = vmatprep.subr.mxu0 0.0
    %109 = vmatpush1.msra.mxu0 %v27
    %110 = vmatprep.subr.mxu0 0.0
    %111 = vmatpush1.msra.mxu0 %v28
    %112 = vmatprep.subr.mxu0 0.0
    %113 = vmatpush1.msra.mxu0 %v29
    %114 = vmatprep.subr.mxu0 0.0
    %115 = vmatpush1.msra.mxu0 %v30
    %116 = vmatprep.subr.mxu0 0.0
    %117 = vmatpush1.msra.mxu0 0.0
    %118 = vmatprep.subr.mxu0 0.0
    %119 = vmatpush1.msra.mxu0 0.0
    %120 = vmatprep.subr.mxu0 0.0
    %121 = vmatpush1.msra.mxu0 0.0
    %122 = vmatprep.subr.mxu0 0.0
    %123 = vmatpush1.msra.mxu0 0.0
    %124 = vmatprep.subr.mxu0 0.0
    %125 = vmatpush1.msra.mxu0 0.0
    %126 = vmatprep.subr.mxu0 0.0
    %127 = vmatpush1.msra.mxu0 0.0
    %128 = vmatprep.subr.mxu0 0.0
    %129 = vmatpush1.msra.mxu0 0.0
    %130 = vmatprep.subr.mxu0 0.0
    %131 = vmatpush1.msra.mxu0 0.0
    %132 = vmatprep.subr.mxu0 0.0
    %133 = vmatpush1.msra.mxu0 0.0
    %134 = vmatprep.subr.mxu0 0.0
    %135 = vmatpush1.msra.mxu0 0.0
    %136 = vmatprep.subr.mxu0 0.0
    %137 = vmatpush1.msra.mxu0 0.0
    %138 = vmatprep.subr.mxu0 0.0
    %139 = vmatpush1.msra.mxu0 0.0
    %140 = vmatprep.subr.mxu0 0.0
    %141 = vmatpush1.msra.mxu0 0.0
    %142 = vmatprep.subr.mxu0 0.0
    %143 = vmatpush1.msra.mxu0 0.0
    %144 = vmatprep.subr.mxu0 0.0
    %145 = vmatpush1.msra.mxu0 0.0
    %146 = vmatprep.subr.mxu0 0.0
    %147 = vmatpush1.msra.mxu0 0.0
    %148 = vmatprep.subr.mxu0 0.0
    %149 = vmatpush1.msra.mxu0 0.0
    %150 = vmatprep.subr.mxu0 0.0
    %151 = vmatpush1.msra.mxu0 0.0
    %152 = vmatprep.subr.mxu0 0.0
    %153 = vmatpush1.msra.mxu0 0.0
    %154 = vmatprep.subr.mxu0 0.0
    %155 = vmatpush1.msra.mxu0 0.0
    %156 = vmatprep.subr.mxu0 0.0
    %157 = vmatpush1.msra.mxu0 0.0
    %158 = vmatprep.subr.mxu0 0.0
    %159 = vmatpush1.msra.mxu0 0.0
    %160 = vmatprep.subr.mxu0 0.0
    %161 = vmatpush1.msra.mxu0 0.0
    %162 = vmatprep.subr.mxu0 0.0
    %163 = vmatpush1.msra.mxu0 0.0
    %164 = vmatprep.subr.mxu0 0.0
    %165 = vmatpush1.msra.mxu0 0.0
    %166 = vmatprep.subr.mxu0 0.0
    %167 = vmatpush1.msra.mxu0 0.0
    %168 = vmatprep.subr.mxu0 0.0
    %169 = vmatpush1.msra.mxu0 0.0
    %170 = vmatprep.subr.mxu0 0.0
    %171 = vmatpush1.msra.mxu0 0.0
    %172 = vmatprep.mubr.f32.mxu0 0.0
    %173 = vmatmul.mubr.f32.gmra.mrb[0].mxu0 %v106
    %v174 = vpop.f32.mrb[0].mxu0
    %v175 = vadd.f32 0.0, %v174
    %v176 = vpop.f32.mrb[0].mxu0
    %177 = vdwg.mxu0
    %s178 = smul.u32 0, 8
    %v179 = vlaneseq
    %v180 = vshrl.u32 %v179, 7
    %v181 = vstv %s178
    %v182 = vadd.s32 %v181, %v180
    %vm183 = vcmp.lt.s32.totalorder %v182, 8
    %v184 = vsel %vm183, 1, 0
    %vm185 = vcmp.eq.s32.totalorder %v184, 1
    %v186 = vsel %vm185, %v102, 0.0
    %v187 = vsel %vm185, %v175, 0.0
    %vm188 = vcmask 64512
    %v189 = vsel %vm188, %v186, -inf
    %190 = vmax.xlane.f32.xlu0 %v189
    %v191 = vpop.xlane.xlu0 %190
    %v192 = vsub.f32 %v186, %v191
    %v193 = vmul.f32 %v192, 1.442695
    %v194 = vpow.pop %v193
    %v195 = vsel %vm188, %v194, 0.0
    %196 = vadd.xlane.f32.xlu0 %v195
    %v197 = vpop.xlane.xlu0 %196
    %v198 = vrcp.pop %v197
    %v199 = vmul.f32 %v194, %v198
    %v200 = vsel %vm185, %v199, 0.0
    %v201 = vsel %vm188, %v187, -inf
    %202 = vmax.xlane.f32.xlu0 %v201
    %v203 = vpop.xlane.xlu0 %202
    %v204 = vsub.f32 %v187, %v203
    %v205 = vmul.f32 %v204, 1.442695
    %v206 = vpow.pop %v205
    %v207 = vsel %vm188, %v206, 0.0
    %208 = vadd.xlane.f32.xlu0 %v207
    %v209 = vpop.xlane.xlu0 %208
    %v210 = vlog2.pop %v209
    %v211 = vmul.f32 %v210, 0.6931472
    %v212 = vadd.f32 %v203, %v211
    %s213 = sld [smem:[#allocation5]]
    %v214 = vmul.f32 %v187, 2.0
    %v215 = vsub.f32 %v212, %v214
    %v216 = vmul.f32 %v200, %v215
    %v217 = vsel %vm188, %v216, 0.0
    %218 = vadd.xlane.f32.xlu0 %v217
    %v219 = vpop.xlane.xlu0 %218
    %v220 = vrot.slane %v219, 4
    %v221 = vadd.f32 %v219, %v220
    %v222 = vrot.slane %v221, 2
    %v223 = vadd.f32 %v221, %v222
    %v224 = vrot.slane %v223, 1
    %v225 = vadd.f32 %v223, %v224
    %s226 = vtos %v225
    %s227 = sadd.f32 %s213, %s226
    %s228 = scalar_lea.smem [#allocation5], 0
    %229 = sst [smem:[%s228]] %s227
    %v230 = vld [vmem:[#allocation2] sm:$0x1]
    %v231 = vsel %vm188, %v200, 0.0
    %v232 = vrot.slane %v231, 4
    %v233 = vadd.f32 %v231, %v232
    %v234 = vrot.slane %v233, 2
    %v235 = vadd.f32 %v233, %v234
    %v236 = vrot.slane %v235, 1
    %v237 = vadd.f32 %v235, %v236
    %v238 = vadd.f32 %v230, %v237
    %vm239 = vcmask 57344
    %240 = vst.msk [vmem:[#allocation2] sm:$0x1] %vm239, %v238
    %v241 = vsel %vm185, %v175, -1e+30
    %v242 = vld [vmem:[#allocation3] sm:$0x1]
    %v243 = vsel %vm188, %v241, -inf
    %v244 = vrot.slane %v243, 4
    %v245 = vmax.f32 %v243, %v244
    %v246 = vrot.slane %v245, 2
    %v247 = vmax.f32 %v245, %v246
    %v248 = vrot.slane %v247, 1
    %v249 = vmax.f32 %v247, %v248
    %v250 = vmax.f32 %v242, %v249
    %v251 = vld [vmem:[#allocation4] sm:$0x1]
    %v252 = vsub.f32 %v242, %v250
    %v253 = vmul.f32 %v252, 1.442695
    %v254 = vpow.pop %v253
    %v255 = vmul.f32 %v251, %v254
    %v257 = vlaneseq
    %v258 = vshrl.u32 %v257, 7
    %v259 = vsub.s32 0, %v258
    %v260 = vrot.slane %v250, %v259
    %v262 = vsub.f32 %v241, %v260
    %v263 = vmul.f32 %v262, 1.442695
    %v264 = vpow.pop %v263
    %v265 = vsel %vm188, %v264, 0.0
    %v266 = vrot.slane %v265, 4
    %v267 = vadd.f32 %v265, %v266
    %v268 = vrot.slane %v267, 2
    %v269 = vadd.f32 %v267, %v268
    %v270 = vrot.slane %v269, 1
    %v271 = vadd.f32 %v269, %v270
    %v272 = vadd.f32 %v255, %v271
    %273 = vst.msk [vmem:[#allocation4] sm:$0x1] %vm239, %v272
    %274 = vst.msk [vmem:[#allocation3] sm:$0x1] %vm239, %v250
    // Predicated region
    $region14: #{tpu_custom_call.1} parent=1 // pred_check
      %p275 = pneg %p12
    $region15: #{tpu_custom_call.1} parent=1 // pred_check_branch
      %277 = sbr.rel (%p275) target = $region17
    $region16: #{tpu_custom_call.1} parent=1 // pred_region
      %v278 = vld [vmem:[#allocation3] sm:$0x1]
      %v279 = vld [vmem:[#allocation4] sm:$0x1]
      %v280 = vlog2.pop %v279
      %v281 = vmul.f32 %v280, 0.6931472
      %v282 = vadd.f32 %v278, %v281
      %s283 = sld [smem:[#allocation5]]
      %v284 = vld [vmem:[#allocation2] sm:$0x1]
      %v285 = vmul.f32 %v282, %v284
      %v286 = vsel %vm239, %v285, 0.0
      %287 = vadd.xlane.f32.xlu0 %v286
      %v288 = vpop.xlane.xlu0 %287
      %v289 = vrot.slane %v288, 4
      %v290 = vadd.f32 %v288, %v289
      %v291 = vrot.slane %v290, 2
      %v292 = vadd.f32 %v290, %v291
      %v293 = vrot.slane %v292, 1
      %v294 = vadd.f32 %v292, %v293
      %s295 = vtos %v294
      %s296 = sadd.f32 %s283, %s295
      %v297 = vrcp.pop 1.12
      %s298 = vtos %v297
      %s299 = smul.f32 %s296, %s298
      %s300 = scalar_lea.smem [#allocation6], 0
      %301 = sst [smem:[%s300]] %s299
    $region17: #{tpu_custom_call.1} parent=1 // pred_fallthru
      _
    // Predicated region
    $region18: #{tpu_custom_call.1} parent=1 // pred_check
      _
    $region19: #{tpu_custom_call.1} parent=1 // pred_check_branch
      %303 = sbr.rel (0) target = $region21
    $region20: #{tpu_custom_call.1} parent=1 // pred_region
      %s305 = ssub.s32 16, 16
      %306 = vsyncadd [#allocation7], %s305
      %309 = dma.smem_to_hbm [#allocation6], 16, %s2, [#allocation7]
    $region21: #{tpu_custom_call.1} parent=1 // pred_fallthru
      _
    // Predicated region
    $region22: #{tpu_custom_call.1} parent=1 // pred_check
      _
    $region23: #{tpu_custom_call.1} parent=1 // pred_check_branch
      %311 = sbr.rel (0) target = $region25
    $region24: #{tpu_custom_call.1} parent=1 // pred_region
      %312 = dma.done [#allocation7], 16
    $region25: #{tpu_custom_call.1} parent=1 // pred_fallthru
      _
    %313 = sfence
    %314 = vsyncpa [#allocation7], 1

</llo_original>
